<compile_context>
chip_gen: v7x
topology: tpu7x:2x2x1
jax: 0.10.0
libtpu: 0.0.40
codegen_flags: <defaults>
</compile_context>

<pallas_src>
import random

import numpy as np
import jax
import jax.numpy as jnp
from jax.experimental import pallas as pl
from jax.experimental.pallas import tpu as pltpu


# ----------------------------- constants ------------------------------------

_LUMA_Q = np.array(
    [[16, 11, 10, 16, 24, 40, 51, 61],
     [12, 12, 14, 19, 26, 58, 60, 55],
     [14, 13, 16, 24, 40, 57, 69, 56],
     [14, 17, 22, 29, 51, 87, 80, 62],
     [18, 22, 37, 56, 68, 109, 103, 77],
     [24, 35, 55, 64, 81, 104, 113, 92],
     [49, 64, 78, 87, 103, 121, 120, 101],
     [72, 92, 95, 98, 112, 100, 103, 99]], dtype=np.float32)

_CHROMA_Q = np.array(
    [[17, 18, 24, 47, 99, 99, 99, 99],
     [18, 21, 26, 66, 99, 99, 99, 99],
     [24, 26, 56, 99, 99, 99, 99, 99],
     [47, 66, 99, 99, 99, 99, 99, 99],
     [99, 99, 99, 99, 99, 99, 99, 99],
     [99, 99, 99, 99, 99, 99, 99, 99],
     [99, 99, 99, 99, 99, 99, 99, 99],
     [99, 99, 99, 99, 99, 99, 99, 99]], dtype=np.float32)


def _dct_matrix_8():
    """Orthonormal 8-point DCT-II matrix."""
    D = np.zeros((8, 8), dtype=np.float64)
    for k in range(8):
        c = np.sqrt(1.0 / 8.0) if k == 0 else np.sqrt(2.0 / 8.0)
        for n in range(8):
            D[k, n] = c * np.cos(np.pi * (2 * n + 1) * k / 16.0)
    return D.astype(np.float32)


def _scaled_qtable(base, quality):
    """libjpeg (IJG) quality scaling of a base quantization table."""
    quality = int(np.clip(quality, 1, 100))
    scale = 5000.0 / quality if quality < 50 else 200.0 - 2.0 * quality
    tbl = np.floor((base * scale + 50.0) / 100.0)
    return np.clip(tbl, 1.0, 255.0).astype(np.float32)


def _default_pack():
    """Blocks per row: match MXU width (256 on v6e/v7x, 128 on v5e/older)."""
    try:
        kind = jax.devices()[0].device_kind.lower()
    except Exception:  # pragma: no cover - be conservative if query fails
        return 2
    for tag in ("v2", "v3", "v4", "v5"):
        if tag in kind:
            return 2
    return 4


_PACK = _default_pack()          # 8x8 blocks per kernel row
_LANES = 64 * _PACK              # 128 (v5e) or 256 (v6e/v7x) lanes per row
_ROW_Q = 16                      # row quantum (bf16-friendly sublane packing)
_TB_MAX = 4096                   # max packed rows per grid step

_D8 = _dct_matrix_8()
_T2 = np.kron(_D8, _D8)          # 2D DCT on a row-major flattened 8x8 block


def _build_ops(quality):
    """Quality-scaled, quant-folded block-diagonal DCT operators.

    Returns (fwd_ops, inv_ops), each (2, L, L) float32 indexed by qsel
    (0 = luma, 1 = chroma):
        quant = round((x - 128) @ fwd_ops[s])   # == round(coeff / q_s)
        rec   = quant @ inv_ops[s] + 128        # == (quant * q_s) @ iDCT
    """
    eye = np.eye(_PACK, dtype=np.float32)
    fwd, inv = [], []
    for base in (_LUMA_Q, _CHROMA_Q):
        q = _scaled_qtable(base, quality).reshape(-1)            # (64,)
        fwd64 = _T2.T * (1.0 / q)[None, :]                       # cols scaled
        inv64 = q[:, None] * _T2                                 # rows scaled
        fwd.append(np.kron(eye, fwd64))
        inv.append(np.kron(eye, inv64))
    return (np.stack(fwd).astype(np.float32),
            np.stack(inv).astype(np.float32))


# ------------------------------ Pallas kernel --------------------------------

def _jpeg_block_kernel(qsel_ref, fwd_ref, inv_ref, x_ref, o_ref):
    """JPEG quantization round-trip on packed 8x8 blocks.

    qsel_ref: (num_tiles,) SMEM int32, per-tile qtable row (scalar prefetch)
    fwd_ref : (1, L, L) quant-folded forward 2D-DCT operator (per qsel)
    inv_ref : (1, L, L) quant-folded inverse 2D-DCT operator (per qsel)
    x_ref   : (TB, L)   f32 packed pixel blocks in [0, 255]
    o_ref   : (TB, L)   bf16 reconstructed packed blocks in [0, 255]
    """
    del qsel_ref                                          # used by index_maps
    x = x_ref[...] - 128.0                                # level shift
    quant = jnp.round(jnp.dot(x, fwd_ref[0],
                              preferred_element_type=jnp.float32))
    rec = jnp.dot(quant, inv_ref[0],
                  preferred_element_type=jnp.float32)
    o_ref[...] = jnp.clip(jnp.round(rec + 128.0), 0.0, 255.0).astype(o_ref.dtype)


def _jpeg_roundtrip(packed, qsel, fwd_ops, inv_ops, tb):
    """packed: (rows, L) f32 in [0, 255] -> reconstructed (rows, L) bf16."""
    rows = packed.shape[0]
    num_tiles = rows // tb
    return pl.pallas_call(
        _jpeg_block_kernel,
        out_shape=jax.ShapeDtypeStruct((rows, _LANES), jnp.bfloat16),
        grid_spec=pltpu.PrefetchScalarGridSpec(
            num_scalar_prefetch=1,
            grid=(num_tiles,),
            in_specs=[
                pl.BlockSpec((1, _LANES, _LANES),
                             lambda i, qsel: (qsel[i], 0, 0)),        # fwd
                pl.BlockSpec((1, _LANES, _LANES),
                             lambda i, qsel: (qsel[i], 0, 0)),        # inv
                pl.BlockSpec((tb, _LANES), lambda i, qsel: (i, 0)),   # x
            ],
            out_specs=pl.BlockSpec((tb, _LANES), lambda i, qsel: (i, 0)),
        ),
        compiler_params=pltpu.CompilerParams(
            dimension_semantics=("parallel",),
            vmem_limit_bytes=32 * 1024 * 1024,
        ),
    )(qsel, fwd_ops, inv_ops, packed)


# ------------------------------ glue (JAX) -----------------------------------

def _round_up(x, m):
    return -(-x // m) * m


def _blockify(ch):
    """(N, H, W) -> (N*(H/8)*(W/8), 64), row-major within each 8x8 block."""
    N, H, W = ch.shape
    b = ch.reshape(N, H // 8, 8, W // 8, 8).transpose(0, 1, 3, 2, 4)
    return b.reshape(N * (H // 8) * (W // 8), 64)


def _unblockify(blocks, N, H, W):
    b = blocks.reshape(N, H // 8, W // 8, 8, 8).transpose(0, 1, 3, 2, 4)
    return b.reshape(N, H, W)


def _pack_rows(blocks64):
    """(nb, 64) -> (ceil(nb/PACK), L); pad ragged blocks with flat 128s."""
    nb = blocks64.shape[0]
    rows = -(-nb // _PACK)
    nb_pad = rows * _PACK
    if nb_pad != nb:
        pad = jnp.full((nb_pad - nb, 64), 128.0, dtype=jnp.float32)
        blocks64 = jnp.concatenate([blocks64, pad], axis=0)
    return blocks64.reshape(rows, _LANES)


def _pad_rows_to(mat, rows_target):
    rows = mat.shape[0]
    if rows_target != rows:
        pad = jnp.full((rows_target - rows, _LANES), 128.0, dtype=jnp.float32)
        mat = jnp.concatenate([mat, pad], axis=0)
    return mat


def _choose_tb(ry, rc):
    """Adaptive tile size: big tiles, tiny padding, >= 4 grid steps if possible."""
    tb = min(_TB_MAX, _round_up(ry, _ROW_Q))
    while tb > _ROW_Q:
        tiles = _round_up(ry, tb) // tb + _round_up(rc, tb) // tb
        if tiles >= 4:
            break
        tb = max(_ROW_Q, _round_up(tb // 2, _ROW_Q))
    return tb


@jax.jit
def _png2jpg_core(img, fwd_ops, inv_ops):
    x = img.astype(jnp.float32)
    N, C, H, W = x.shape
    assert C == 3 and H % 8 == 0 and W % 8 == 0
    r, g, b = x[:, 0], x[:, 1], x[:, 2]

    # RGB -> YCbCr (JFIF)
    y = 0.299 * r + 0.587 * g + 0.114 * b
    cb = -0.168736 * r - 0.331264 * g + 0.5 * b + 128.0
    cr = 0.5 * r - 0.418688 * g - 0.081312 * b + 128.0

    y_blk = _blockify(y)
    c_blk = jnp.concatenate([_blockify(cb), _blockify(cr)], axis=0)
    nb_y, nb_c = y_blk.shape[0], c_blk.shape[0]

    y_mat = _pack_rows(y_blk)
    c_mat = _pack_rows(c_blk)
    ry, rc = y_mat.shape[0], c_mat.shape[0]

    tb = _choose_tb(ry, rc)                      # static (shape-derived) int
    ry_p, rc_p = _round_up(ry, tb), _round_up(rc, tb)
    packed = jnp.concatenate([_pad_rows_to(y_mat, ry_p),
                              _pad_rows_to(c_mat, rc_p)], axis=0)

    qsel = jnp.concatenate([jnp.zeros((ry_p // tb,), jnp.int32),
                            jnp.ones((rc_p // tb,), jnp.int32)])

    out = _jpeg_roundtrip(packed, qsel, fwd_ops, inv_ops, tb)   # bf16

    y_rec = out[:ry_p].reshape(-1, 64)[:nb_y]
    c_rec = out[ry_p:].reshape(-1, 64)[:nb_c]

    y2 = _unblockify(y_rec, N, H, W).astype(jnp.float32)
    cb2 = _unblockify(c_rec[:nb_c // 2], N, H, W).astype(jnp.float32)
    cr2 = _unblockify(c_rec[nb_c // 2:], N, H, W).astype(jnp.float32)

    # YCbCr -> RGB
    r2 = y2 + 1.402 * (cr2 - 128.0)
    g2 = y2 - 0.344136 * (cb2 - 128.0) - 0.714136 * (cr2 - 128.0)
    b2 = y2 + 1.772 * (cb2 - 128.0)
    out_img = jnp.stack([r2, g2, b2], axis=1)
    return jnp.clip(jnp.round(out_img), 0.0, 255.0).astype(jnp.uint8)


def png2jpg(img, low, high, seed=None):
    """JPEG re-compression degradation of an NCHW RGB batch in [0, 255]."""
    # Host RNG for the quality draw (matches random.randint in the module and
    # keeps the rest of the wrapper jittable — no device->host sync).
    rng = random.Random(seed) if seed is not None else random
    quality = rng.randint(low, high)
    fwd_ops, inv_ops = _build_ops(quality)
    return _png2jpg_core(img, jnp.asarray(fwd_ops), jnp.asarray(inv_ops))


if __name__ == "__main__":
    key = jax.random.PRNGKey(0)

    # small deterministic input: batch=2, RGB, 16x16, values in [0, 255]
    img = jax.random.randint(key, (2, 3, 16, 16), 0, 256,
                             dtype=jnp.int32).astype(jnp.float32)

    low, high = 60, 95   # JPEG quality range (module's low/high)
    out = png2jpg(img, low, high, seed=0)
    out = jax.block_until_ready(out)

    assert out.shape == (2, 3, 16, 16) and out.dtype == jnp.uint8
    print("KERNEL_OK")
</pallas_src>

<mosaic_0001>
module attributes {stable_mosaic.version = 11 : i64} {
  func.func @_jpeg_block_kernel(%arg0: i32, %arg1: memref<2xi32, #tpu.memory_space<smem>>, %arg2: memref<1x256x256xf32, #tpu.memory_space<vmem>>, %arg3: memref<1x256x256xf32, #tpu.memory_space<vmem>>, %arg4: memref<16x256xf32, #tpu.memory_space<vmem>>, %arg5: memref<16x256xbf16, #tpu.memory_space<vmem>>) attributes {dimension_semantics = [#tpu.dimension_semantics<parallel>], iteration_bounds = array<i64: 2>, scalar_prefetch = 1 : i64, scratch_operands = 0 : i64, tpu.core_type = #tpu.core_type<tc>, window_params = [{transform_indices = @transform_0, window_bounds = array<i64: 1, 256, 256>}, {transform_indices = @transform_1, window_bounds = array<i64: 1, 256, 256>}, {transform_indices = @transform_2, window_bounds = array<i64: 16, 256>}, {transform_indices = @transform_3, window_bounds = array<i64: 16, 256>}]} {
    %c0 = arith.constant 0 : index
    %c0_0 = arith.constant 0 : index
    %0 = vector.load %arg4[%c0, %c0_0] : memref<16x256xf32, #tpu.memory_space<vmem>>, vector<16x256xf32>
    %cst = arith.constant 1.280000e+02 : f32
    %1 = vector.broadcast %cst : f32 to vector<16x256xf32>
    %2 = arith.subf %0, %1 : vector<16x256xf32>
    %c0_1 = arith.constant 0 : index
    %c0_2 = arith.constant 0 : index
    %c0_3 = arith.constant 0 : index
    %3 = vector.load %arg2[%c0_1, %c0_2, %c0_3] : memref<1x256x256xf32, #tpu.memory_space<vmem>>, vector<1x256x256xf32>
    %4 = vector.shape_cast %3 : vector<1x256x256xf32> to vector<256x256xf32>
    %cst_4 = arith.constant dense<0.000000e+00> : vector<16x256xf32>
    %5 = tpu.matmul %2, %4, %cst_4 {dimension_numbers = #tpu.dot_dimension_numbers<[1], [0], [0], [1], [0, 0, 1, 1], [], []>} : vector<16x256xf32>, vector<256x256xf32>, vector<16x256xf32> -> vector<16x256xf32>
    %6 = math.roundeven %5 : vector<16x256xf32>
    %c0_5 = arith.constant 0 : index
    %c0_6 = arith.constant 0 : index
    %c0_7 = arith.constant 0 : index
    %7 = vector.load %arg3[%c0_5, %c0_6, %c0_7] : memref<1x256x256xf32, #tpu.memory_space<vmem>>, vector<1x256x256xf32>
    %8 = vector.shape_cast %7 : vector<1x256x256xf32> to vector<256x256xf32>
    %cst_8 = arith.constant dense<0.000000e+00> : vector<16x256xf32>
    %9 = tpu.matmul %6, %8, %cst_8 {dimension_numbers = #tpu.dot_dimension_numbers<[1], [0], [0], [1], [0, 0, 1, 1], [], []>} : vector<16x256xf32>, vector<256x256xf32>, vector<16x256xf32> -> vector<16x256xf32>
    %cst_9 = arith.constant 1.280000e+02 : f32
    %10 = vector.broadcast %cst_9 : f32 to vector<16x256xf32>
    %11 = arith.addf %9, %10 : vector<16x256xf32>
    %12 = math.roundeven %11 : vector<16x256xf32>
    %cst_10 = arith.constant 0.000000e+00 : f32
    %cst_11 = arith.constant 2.550000e+02 : f32
    %13 = vector.broadcast %cst_10 : f32 to vector<16x256xf32>
    %14 = arith.maximumf %13, %12 : vector<16x256xf32>
    %15 = vector.broadcast %cst_11 : f32 to vector<16x256xf32>
    %16 = arith.minimumf %15, %14 : vector<16x256xf32>
    %17 = arith.truncf %16 : vector<16x256xf32> to vector<16x256xbf16>
    %c0_12 = arith.constant 0 : index
    %c0_13 = arith.constant 0 : index
    %18 = vector.load %arg5[%c0_12, %c0_13] : memref<16x256xbf16, #tpu.memory_space<vmem>>, vector<16x256xbf16>
    tpu.vector_store %arg5[%c0_12, %c0_13], %17 {strides = array<i32>} : memref<16x256xbf16, #tpu.memory_space<vmem>>, vector<16x256xbf16>,
    return
  }
  func.func @transform_0(%arg0: i32, %arg1: memref<2xi32, #tpu.memory_space<smem>>) -> (i32, i32, i32) {
    %0 = arith.index_cast %arg0 : i32 to index
    %1 = memref.load %arg1[%0] : memref<2xi32, #tpu.memory_space<smem>>
    %c0_i32 = arith.constant 0 : i32
    %c0_i32_0 = arith.constant 0 : i32
    %c0_i32_1 = arith.constant 0 : i32
    return %1, %c0_i32, %c0_i32_0 : i32, i32, i32
  }
  func.func @transform_1(%arg0: i32, %arg1: memref<2xi32, #tpu.memory_space<smem>>) -> (i32, i32, i32) {
    %0 = arith.index_cast %arg0 : i32 to index
    %1 = memref.load %arg1[%0] : memref<2xi32, #tpu.memory_space<smem>>
    %c0_i32 = arith.constant 0 : i32
    %c0_i32_0 = arith.constant 0 : i32
    %c0_i32_1 = arith.constant 0 : i32
    return %1, %c0_i32, %c0_i32_0 : i32, i32, i32
  }
  func.func @transform_2(%arg0: i32, %arg1: memref<2xi32, #tpu.memory_space<smem>>) -> (i32, i32) {
    %c0_i32 = arith.constant 0 : i32
    %c0_i32_0 = arith.constant 0 : i32
    return %arg0, %c0_i32 : i32, i32
  }
  func.func @transform_3(%arg0: i32, %arg1: memref<2xi32, #tpu.memory_space<smem>>) -> (i32, i32) {
    %c0_i32 = arith.constant 0 : i32
    %c0_i32_0 = arith.constant 0 : i32
    return %arg0, %c0_i32 : i32, i32
  }
}

</mosaic_0001>

<llo_original>
// kernel: _png2jpg_core.1
$region0: #{_png2jpg_core.1}
  #allocation0 [shape = 'u32[]', space=smem, size = 0x4, offset = 0x4, fixed_abs, tag = 'smem constant byte address 0x4 - core index']
  #allocation1 [shape = 'u32[144,128]{1,0:T(1,128)}', space=vmem, size = 0x12000, scoped, tag = 'internal scratch']
  #allocation2 [shape = 's32[1]{0}', space=sflag, size = 0x4, scoped, tag = 'scoped memory for _png2jpg_core.1']
  #allocation3 [shape = 'u8[512]{0}', space=smem, size = 0x200, scoped, tag = 'prefetched SMEM operand 0']
  %s0 = inlined_call_operand.vmem [shape: s32[2], index: 0, kind: input, shape index: {}]
  %s1 = inlined_call_operand.vmem [shape: f32[2,256,256], index: 1, kind: input, shape index: {}]
  %s2 = inlined_call_operand.hbm [shape: f32[2,256,256], index: 2, kind: input, shape index: {}]
  %s3 = inlined_call_operand.vmem [shape: f32[32,256], index: 3, kind: input, shape index: {}]
  %s4 = inlined_call_operand.vmem [shape: bf16[32,256], index: 4, kind: output, shape index: {}]
  %s5 = sld [smem:[#allocation0]]
  $region49: #{_png2jpg_core.1} parent=0
    _
  %s7 = ssub.s32 1, %s5
  %s8 = scalar_select 0, %s7, %s5
  %s9 = sshll.u32 %s0, 4
  %s10 = int_to_ptr.vmem [resolvable:$true] %s9
  %12 = dma.vmem_to_smem %s10, 16, [#allocation3], [#allocation2]
  %13 = dma.done [#allocation2], 16
  %14 = sfence
  $region1: #{_png2jpg_core.1} parent=0
    #allocation4 [shape = 'u8[524288]{0}', space=vmem, size = 0x80000, scoped, tag = 'input window, operand 2']
    #allocation5 [shape = 's32[2]{0}', space=sflag, size = 0x8, scoped, tag = 'scoped memory for _png2jpg_core.1']
    %15 = vsyncpa [#allocation5], 0
    %s16 = scalar_lea.sflag [#allocation5], 1
    %17 = vsyncpa %s16, 0
    loop: start=0, step=1, limit=4
    $region2: #{_png2jpg_core.1} parent=1 // loop_pre_header
      _
    $region3: #{_png2jpg_core.1} parent=1 // loop_header
      %s19 = sphi 0, %s23
      %p20 = scmp.ge.s32.totalorder %s19, 4
      %s31 = sphi 0, %s33
      %s34 = sphi 0, %s31
      %s35 = sphi 0, %s34
      %s51 = sphi 0, %s35
      %s59 = sphi 0, %s61
      %s62 = sphi 0, %s59
      %s63 = sphi 0, %s62
      %s79 = sphi 0, %s63
      %s85 = sphi 0, %s87
      %s88 = sphi 0, %s85
      %s89 = sphi 0, %s88
      %s105 = sphi 0, %s89
      %s111 = sphi 0, %s113
      %s114 = sphi 0, %s111
      %s115 = sphi 0, %s114
      %s131 = sphi 0, %s115
    $region4: #{_png2jpg_core.1} parent=1 // loop_header_branch
      %22 = sbr.rel (%p20) target = $region8
    $region5: #{_png2jpg_core.1} parent=1 // loop_body
      %s24 = ssub.s32 %s19, 1
      %s25 = ssub.s32 %s19, 2
      %s26 = sadd.s32 %s19, 1
      %s27 = sld [smem:[#allocation3 + %s19]]
      %s28 = sld [smem:[#allocation3 + %s26]]
      %s29 = ssub.s32 %s27, %s28
      %p30 = scmp.eq.s32.totalorder %s29, 0
      %s32 = sadd.s32 %s31, 1
      %s33 = scalar_select %p30, %s31, %s32
      %p36 = pneg %p30
      %p37 = scmp.eq.s32.totalorder %s19, 1
      %p38 = por %p36, %p37
      %p39 = scmp.ne.s32.totalorder %s31, %s34
      %p40 = scmp.eq.s32.totalorder %s19, 0
      %p41 = por %p39, %p40
      %p42 = scmp.ne.s32.totalorder %s31, %s34
      %p43 = scmp.eq.s32.totalorder %s24, 1
      %p44 = por %p42, %p43
      %p45 = scmp.ne.s32.totalorder %s34, %s35
      %p46 = scmp.eq.s32.totalorder %s24, 0
      %p47 = por %p45, %p46
      %p48 = scmp.ne.s32.totalorder %s34, %s35
      %p49 = scmp.eq.s32.totalorder %s25, 1
      %p50 = por %p48, %p49
      %p52 = scmp.ne.s32.totalorder %s35, %s51
      %p53 = scmp.eq.s32.totalorder %s25, 0
      %p54 = por %p52, %p53
      %s55 = sld [smem:[#allocation3 + %s19]]
      %s56 = sld [smem:[#allocation3 + %s26]]
      %s57 = ssub.s32 %s55, %s56
      %p58 = scmp.eq.s32.totalorder %s57, 0
      %s60 = sadd.s32 %s59, 1
      %s61 = scalar_select %p58, %s59, %s60
      %p64 = pneg %p58
      %p65 = scmp.eq.s32.totalorder %s19, 1
      %p66 = por %p64, %p65
      %p67 = scmp.ne.s32.totalorder %s59, %s62
      %p68 = scmp.eq.s32.totalorder %s19, 0
      %p69 = por %p67, %p68
      %p70 = scmp.ne.s32.totalorder %s59, %s62
      %p71 = scmp.eq.s32.totalorder %s24, 1
      %p72 = por %p70, %p71
      %p73 = scmp.ne.s32.totalorder %s62, %s63
      %p74 = scmp.eq.s32.totalorder %s24, 0
      %p75 = por %p73, %p74
      %p76 = scmp.ne.s32.totalorder %s62, %s63
      %p77 = scmp.eq.s32.totalorder %s25, 1
      %p78 = por %p76, %p77
      %p80 = scmp.ne.s32.totalorder %s63, %s79
      %p81 = scmp.eq.s32.totalorder %s25, 0
      %p82 = por %p80, %p81
      %s83 = ssub.s32 %s19, %s26
      %p84 = scmp.eq.s32.totalorder %s83, 0
      %s86 = sadd.s32 %s85, 1
      %s87 = scalar_select %p84, %s85, %s86
      %p90 = pneg %p84
      %p91 = scmp.eq.s32.totalorder %s19, 1
      %p92 = por %p90, %p91
      %p93 = scmp.ne.s32.totalorder %s85, %s88
      %p94 = scmp.eq.s32.totalorder %s19, 0
      %p95 = por %p93, %p94
      %p96 = scmp.ne.s32.totalorder %s85, %s88
      %p97 = scmp.eq.s32.totalorder %s24, 1
      %p98 = por %p96, %p97
      %p99 = scmp.ne.s32.totalorder %s88, %s89
      %p100 = scmp.eq.s32.totalorder %s24, 0
      %p101 = por %p99, %p100
      %p102 = scmp.ne.s32.totalorder %s88, %s89
      %p103 = scmp.eq.s32.totalorder %s25, 1
      %p104 = por %p102, %p103
      %p106 = scmp.ne.s32.totalorder %s89, %s105
      %p107 = scmp.eq.s32.totalorder %s25, 0
      %p108 = por %p106, %p107
      %s109 = ssub.s32 %s19, %s26
      %p110 = scmp.eq.s32.totalorder %s109, 0
      %s112 = sadd.s32 %s111, 1
      %s113 = scalar_select %p110, %s111, %s112
      %p116 = pneg %p110
      %p117 = scmp.eq.s32.totalorder %s19, 1
      %p118 = por %p116, %p117
      %p119 = scmp.ne.s32.totalorder %s111, %s114
      %p120 = scmp.eq.s32.totalorder %s19, 0
      %p121 = por %p119, %p120
      %p122 = scmp.ne.s32.totalorder %s111, %s114
      %p123 = scmp.eq.s32.totalorder %s24, 1
      %p124 = por %p122, %p123
      %p125 = scmp.ne.s32.totalorder %s114, %s115
      %p126 = scmp.eq.s32.totalorder %s24, 0
      %p127 = por %p125, %p126
      %p128 = scmp.ne.s32.totalorder %s114, %s115
      %p129 = scmp.eq.s32.totalorder %s25, 1
      %p130 = por %p128, %p129
      %p132 = scmp.ne.s32.totalorder %s115, %s131
      %p133 = scmp.eq.s32.totalorder %s25, 0
      %p134 = por %p132, %p133
      %p135 = scmp.le.s32.totalorder 1, %s19
      %p136 = scmp.lt.s32.totalorder %s19, 3
      %p137 = pnand %p135, %p136
      %p138 = pneg %p137
      // Predicated region
      $region9: #{_png2jpg_core.1} parent=5 // pred_check
        _
      $region10: #{_png2jpg_core.1} parent=5 // pred_check_branch
        %140 = sbr.rel (%p137) target = $region12
      $region11: #{_png2jpg_core.1} parent=5 // pred_region
        %s141 = ssub.s32 %s19, 1
      $region12: #{_png2jpg_core.1} parent=5 // pred_fallthru
        _
      %p142 = scmp.lt.s32.totalorder %s19, 2
      // Predicated region
      $region13: #{_png2jpg_core.1} parent=5 // pred_check
        %p143 = pneg %p142
      $region14: #{_png2jpg_core.1} parent=5 // pred_check_branch
        %145 = sbr.rel (%p143) target = $region16
      $region15: #{_png2jpg_core.1} parent=5 // pred_region
        // Predicated region
        $region17: #{_png2jpg_core.1} parent=15 // pred_check
          %p146 = pneg %p41
        $region18: #{_png2jpg_core.1} parent=15 // pred_check_branch
          %148 = sbr.rel (%p146) target = $region20
        $region19: #{_png2jpg_core.1} parent=15 // pred_region
          %s149 = sld [smem:[#allocation3 + %s19]]
          %p150 = scmp.lt.s32.totalorder %s149, 1
          %s151 = scalar_select %p150, %s149, 1
          %s152 = smul.addr %s151, 64
          %s153 = smul.addr %s152, 8
          %s154 = scalar_lea.vmem %s1, %s153
          %s155 = sld [smem:[#allocation3 + %s19]]
        $region20: #{_png2jpg_core.1} parent=15 // pred_fallthru
          _
        // Predicated region
        $region21: #{_png2jpg_core.1} parent=15 // pred_check
          %p156 = pneg %p69
        $region22: #{_png2jpg_core.1} parent=15 // pred_check_branch
          %158 = sbr.rel (%p156) target = $region24
        $region23: #{_png2jpg_core.1} parent=15 // pred_region
          %s159 = sand.u32 %s59, 1
          %s160 = scalar_lea.sflag [#allocation5], %s159
          %s161 = sand.u32 %s59, 1
          %s162 = smul.addr %s161, 512
          %s163 = scalar_lea.vmem [#allocation4], %s162
          %s164 = sld [smem:[#allocation3 + %s19]]
          %s166 = ssub.s32 8192, 8192
          %167 = vsyncadd %s160, %s166
          %s168 = smul.addr %s164, 64
          %s169 = smul.addr %s168, 128
          %s170 = scalar_lea.hbm %s2, %s169
          %s171 = sshll.u32 %s163, 4
          %s172 = int_to_ptr.vmem [resolvable:$true] %s171
          %177 = dma.hbm_to_vmem [thread:$0]  %s170, 8192, %s172, %s160, 256, 256, 16
        $region24: #{_png2jpg_core.1} parent=15 // pred_fallthru
          _
        // Predicated region
        $region25: #{_png2jpg_core.1} parent=15 // pred_check
          %p178 = pneg %p95
        $region26: #{_png2jpg_core.1} parent=15 // pred_check_branch
          %180 = sbr.rel (%p178) target = $region28
        $region27: #{_png2jpg_core.1} parent=15 // pred_region
          %s181 = smul.u32 2, %s19
          %p182 = scmp.lt.s32.totalorder %s181, 3
          %s183 = scalar_select %p182, %s181, 3
          %s184 = smul.addr %s183, 2
          %s185 = smul.addr %s184, 8
          %s186 = scalar_lea.vmem %s3, %s185
          %s187 = smul.u32 2, %s19
        $region28: #{_png2jpg_core.1} parent=15 // pred_fallthru
          _
      $region16: #{_png2jpg_core.1} parent=5 // pred_fallthru
        _
      %p188 = scmp.le.s32.totalorder 1, %s19
      %p189 = scmp.lt.s32.totalorder %s19, 3
      %p190 = pnand %p188, %p189
      %p191 = pneg %p190
      // Predicated region
      $region29: #{_png2jpg_core.1} parent=5 // pred_check
        _
      $region30: #{_png2jpg_core.1} parent=5 // pred_check_branch
        %193 = sbr.rel (%p190) target = $region32
      $region31: #{_png2jpg_core.1} parent=5 // pred_region
        %s194 = ssub.s32 %s19, 1
        %s195 = sand.u32 %s62, 1
        %s196 = scalar_lea.sflag [#allocation5], %s195
        %s197 = sand.u32 %s62, 1
        %s198 = smul.addr %s197, 512
        %s199 = scalar_lea.vmem [#allocation4], %s198
        // Predicated region
        $region33: #{_png2jpg_core.1} parent=31 // pred_check
          %p200 = pneg %p75
        $region34: #{_png2jpg_core.1} parent=31 // pred_check_branch
          %202 = sbr.rel (%p200) target = $region36
        $region35: #{_png2jpg_core.1} parent=31 // pred_region
          %203 = dma.done %s196, 8192
        $region36: #{_png2jpg_core.1} parent=31 // pred_fallthru
          _
        %s204 = sld [smem:[#allocation3 + %s24]]
        %p205 = scmp.lt.s32.totalorder %s204, 1
        %s206 = scalar_select %p205, %s204, 1
        %s207 = smul.addr %s206, 64
        %s208 = smul.addr %s207, 8
        %s209 = scalar_lea.vmem %s1, %s208
        %p210 = pneg %p47
        %p211 = pneg %p44
        %s212 = sand.u32 %s62, 1
        %s213 = scalar_lea.sflag [#allocation5], %s212
        %s214 = sand.u32 %s62, 1
        %s215 = smul.addr %s214, 512
        %s216 = scalar_lea.vmem [#allocation4], %s215
        %p217 = pneg %p75
        %p218 = pneg %p72
        %s219 = smul.u32 2, %s24
        %p220 = scmp.lt.s32.totalorder %s219, 3
        %s221 = scalar_select %p220, %s219, 3
        %s222 = smul.addr %s221, 2
        %s223 = smul.addr %s222, 8
        %s224 = scalar_lea.vmem %s3, %s223
        %p225 = pneg %p101
        %p226 = pneg %p98
        %p227 = pneg %p127
        %p228 = pneg %p124
        %s229 = smul.u32 2, %s24
        %p230 = scmp.lt.s32.totalorder %s229, 3
        %s231 = scalar_select %p230, %s229, 3
        %s232 = smul.addr %s231, 2
        %s233 = smul.addr %s232, 4
        %s234 = scalar_lea.vmem %s4, %s233
        %s235 = sld [smem:[#allocation3 + %s24]]
        %p236 = scmp.lt.s32.totalorder %s235, 1
        %s237 = scalar_select %p236, %s235, 1
        %s238 = smul.addr %s237, 64
        %s239 = smul.addr %s238, 8
        %s240 = scalar_lea.vmem %s1, %s239
        %s241 = sld [smem:[#allocation3 + %s24]]
        %s242 = sld [smem:[#allocation3 + %s24]]
        %s243 = smul.u32 2, %s24
        %p244 = scmp.lt.s32.totalorder %s243, 3
        %s245 = scalar_select %p244, %s243, 3
        %s246 = smul.addr %s245, 2
        %s247 = smul.addr %s246, 8
        %s248 = scalar_lea.vmem %s3, %s247
        %s249 = smul.u32 2, %s24
        %s250 = smul.u32 2, %s24
        %p251 = scmp.lt.s32.totalorder %s250, 3
        %s252 = scalar_select %p251, %s250, 3
        %s253 = smul.addr %s252, 2
        %s254 = smul.addr %s253, 4
        %s255 = scalar_lea.vmem %s4, %s254
        %s256 = smul.u32 2, %s24
        %v257 = vld [vmem:[%s248] sm:$0xff]
        %v258 = vld [vmem:[%s248 + $0x8] sm:$0xff]
        %v259 = vld [vmem:[%s248 + $0x10] sm:$0xff]
        %v260 = vld [vmem:[%s248 + $0x18] sm:$0xff]
        %v261 = vsub.f32 %v257, 128.0
        %v262 = vsub.f32 %v258, 128.0
        %v263 = vsub.f32 %v259, 128.0
        %v264 = vsub.f32 %v260, 128.0
        %v265 = vld [vmem:[%s240] sm:$0xff]
        %v266 = vld [vmem:[%s240 + $0x8] sm:$0xff]
        %v267 = vld [vmem:[%s240 + $0x10] sm:$0xff]
        %v268 = vld [vmem:[%s240 + $0x18] sm:$0xff]
        %v269 = vld [vmem:[%s240 + $0x20] sm:$0xff]
        %v270 = vld [vmem:[%s240 + $0x28] sm:$0xff]
        %v271 = vld [vmem:[%s240 + $0x30] sm:$0xff]
        %v272 = vld [vmem:[%s240 + $0x38] sm:$0xff]
        %v273 = vld [vmem:[%s240 + $0x40] sm:$0xff]
        %v274 = vld [vmem:[%s240 + $0x48] sm:$0xff]
        %v275 = vld [vmem:[%s240 + $0x50] sm:$0xff]
        %v276 = vld [vmem:[%s240 + $0x58] sm:$0xff]
        %v277 = vld [vmem:[%s240 + $0x60] sm:$0xff]
        %v278 = vld [vmem:[%s240 + $0x68] sm:$0xff]
        %v279 = vld [vmem:[%s240 + $0x70] sm:$0xff]
        %v280 = vld [vmem:[%s240 + $0x78] sm:$0xff]
        %v281 = vld [vmem:[%s240 + $0x80] sm:$0xff]
        %v282 = vld [vmem:[%s240 + $0x88] sm:$0xff]
        %v283 = vld [vmem:[%s240 + $0x90] sm:$0xff]
        %v284 = vld [vmem:[%s240 + $0x98] sm:$0xff]
        %v285 = vld [vmem:[%s240 + $0xa0] sm:$0xff]
        %v286 = vld [vmem:[%s240 + $0xa8] sm:$0xff]
        %v287 = vld [vmem:[%s240 + $0xb0] sm:$0xff]
        %v288 = vld [vmem:[%s240 + $0xb8] sm:$0xff]
        %v289 = vld [vmem:[%s240 + $0xc0] sm:$0xff]
        %v290 = vld [vmem:[%s240 + $0xc8] sm:$0xff]
        %v291 = vld [vmem:[%s240 + $0xd0] sm:$0xff]
        %v292 = vld [vmem:[%s240 + $0xd8] sm:$0xff]
        %v293 = vld [vmem:[%s240 + $0xe0] sm:$0xff]
        %v294 = vld [vmem:[%s240 + $0xe8] sm:$0xff]
        %v295 = vld [vmem:[%s240 + $0xf0] sm:$0xff]
        %v296 = vld [vmem:[%s240 + $0xf8] sm:$0xff]
        %v297 = vld [vmem:[%s240 + $0x100] sm:$0xff]
        %v298 = vld [vmem:[%s240 + $0x108] sm:$0xff]
        %v299 = vld [vmem:[%s240 + $0x110] sm:$0xff]
        %v300 = vld [vmem:[%s240 + $0x118] sm:$0xff]
        %v301 = vld [vmem:[%s240 + $0x120] sm:$0xff]
        %v302 = vld [vmem:[%s240 + $0x128] sm:$0xff]
        %v303 = vld [vmem:[%s240 + $0x130] sm:$0xff]
        %v304 = vld [vmem:[%s240 + $0x138] sm:$0xff]
        %v305 = vld [vmem:[%s240 + $0x140] sm:$0xff]
        %v306 = vld [vmem:[%s240 + $0x148] sm:$0xff]
        %v307 = vld [vmem:[%s240 + $0x150] sm:$0xff]
        %v308 = vld [vmem:[%s240 + $0x158] sm:$0xff]
        %v309 = vld [vmem:[%s240 + $0x160] sm:$0xff]
        %v310 = vld [vmem:[%s240 + $0x168] sm:$0xff]
        %v311 = vld [vmem:[%s240 + $0x170] sm:$0xff]
        %v312 = vld [vmem:[%s240 + $0x178] sm:$0xff]
        %v313 = vld [vmem:[%s240 + $0x180] sm:$0xff]
        %v314 = vld [vmem:[%s240 + $0x188] sm:$0xff]
        %v315 = vld [vmem:[%s240 + $0x190] sm:$0xff]
        %v316 = vld [vmem:[%s240 + $0x198] sm:$0xff]
        %v317 = vld [vmem:[%s240 + $0x1a0] sm:$0xff]
        %v318 = vld [vmem:[%s240 + $0x1a8] sm:$0xff]
        %v319 = vld [vmem:[%s240 + $0x1b0] sm:$0xff]
        %v320 = vld [vmem:[%s240 + $0x1b8] sm:$0xff]
        %v321 = vld [vmem:[%s240 + $0x1c0] sm:$0xff]
        %v322 = vld [vmem:[%s240 + $0x1c8] sm:$0xff]
        %v323 = vld [vmem:[%s240 + $0x1d0] sm:$0xff]
        %v324 = vld [vmem:[%s240 + $0x1d8] sm:$0xff]
        %v325 = vld [vmem:[%s240 + $0x1e0] sm:$0xff]
        %v326 = vld [vmem:[%s240 + $0x1e8] sm:$0xff]
        %v327 = vld [vmem:[%s240 + $0x1f0] sm:$0xff]
        %v328 = vld [vmem:[%s240 + $0x1f8] sm:$0xff]
        %329 = vmatprep.subr.mxu0 %v266
        %330 = vmatpush1.msra.mxu0 %v265
        %331 = vmatprep.subr.mxu0 %v268
        %332 = vmatpush1.msra.mxu0 %v267
        %333 = vmatprep.subr.mxu0 %v270
        %334 = vmatpush1.msra.mxu0 %v269
        %335 = vmatprep.subr.mxu0 %v272
        %336 = vmatpush1.msra.mxu0 %v271
        %337 = vmatprep.subr.mxu0 %v274
        %338 = vmatpush1.msra.mxu0 %v273
        %339 = vmatprep.subr.mxu0 %v276
        %340 = vmatpush1.msra.mxu0 %v275
        %341 = vmatprep.subr.mxu0 %v278
        %342 = vmatpush1.msra.mxu0 %v277
        %343 = vmatprep.subr.mxu0 %v280
        %344 = vmatpush1.msra.mxu0 %v279
        %345 = vmatprep.subr.mxu0 %v282
        %346 = vmatpush1.msra.mxu0 %v281
        %347 = vmatprep.subr.mxu0 %v284
        %348 = vmatpush1.msra.mxu0 %v283
        %349 = vmatprep.subr.mxu0 %v286
        %350 = vmatpush1.msra.mxu0 %v285
        %351 = vmatprep.subr.mxu0 %v288
        %352 = vmatpush1.msra.mxu0 %v287
        %353 = vmatprep.subr.mxu0 %v290
        %354 = vmatpush1.msra.mxu0 %v289
        %355 = vmatprep.subr.mxu0 %v292
        %356 = vmatpush1.msra.mxu0 %v291
        %357 = vmatprep.subr.mxu0 %v294
        %358 = vmatpush1.msra.mxu0 %v293
        %359 = vmatprep.subr.mxu0 %v296
        %360 = vmatpush1.msra.mxu0 %v295
        %361 = vmatprep.subr.mxu0 %v298
        %362 = vmatpush1.msra.mxu0 %v297
        %363 = vmatprep.subr.mxu0 %v300
        %364 = vmatpush1.msra.mxu0 %v299
        %365 = vmatprep.subr.mxu0 %v302
        %366 = vmatpush1.msra.mxu0 %v301
        %367 = vmatprep.subr.mxu0 %v304
        %368 = vmatpush1.msra.mxu0 %v303
        %369 = vmatprep.subr.mxu0 %v306
        %370 = vmatpush1.msra.mxu0 %v305
        %371 = vmatprep.subr.mxu0 %v308
        %372 = vmatpush1.msra.mxu0 %v307
        %373 = vmatprep.subr.mxu0 %v310
        %374 = vmatpush1.msra.mxu0 %v309
        %375 = vmatprep.subr.mxu0 %v312
        %376 = vmatpush1.msra.mxu0 %v311
        %377 = vmatprep.subr.mxu0 %v314
        %378 = vmatpush1.msra.mxu0 %v313
        %379 = vmatprep.subr.mxu0 %v316
        %380 = vmatpush1.msra.mxu0 %v315
        %381 = vmatprep.subr.mxu0 %v318
        %382 = vmatpush1.msra.mxu0 %v317
        %383 = vmatprep.subr.mxu0 %v320
        %384 = vmatpush1.msra.mxu0 %v319
        %385 = vmatprep.subr.mxu0 %v322
        %386 = vmatpush1.msra.mxu0 %v321
        %387 = vmatprep.subr.mxu0 %v324
        %388 = vmatpush1.msra.mxu0 %v323
        %389 = vmatprep.subr.mxu0 %v326
        %390 = vmatpush1.msra.mxu0 %v325
        %391 = vmatprep.subr.mxu0 %v328
        %392 = vmatpush1.msra.mxu0 %v327
        %393 = vmatprep.mubr.f32.mxu0 %v262
        %394 = vmatmul.mubr.f32.gmra.mrb[0].mxu0 %v261
        %v395 = vpop.f32.mrb[0].mxu0
        %v396 = vadd.f32 0.0, %v395
        %v397 = vpop.f32.mrb[0].mxu0
        %v398 = vadd.f32 0.0, %v397
        %399 = vmatprep.mubr.f32.mxu0 %v264
        %400 = vmatmul.mubr.f32.gmra.mrb[0].mxu0 %v263
        %v401 = vpop.f32.mrb[0].mxu0
        %v402 = vadd.f32 0.0, %v401
        %v403 = vpop.f32.mrb[0].mxu0
        %v404 = vadd.f32 0.0, %v403
        %405 = vdwg.mxu0
        %v406 = vround.ne.pseudo %v396
        %v407 = vround.ne.pseudo %v398
        %v408 = vround.ne.pseudo %v402
        %v409 = vround.ne.pseudo %v404
        %v410 = vld [vmem:[%s199] sm:$0xff]
        %v411 = vld [vmem:[%s199 + $0x8] sm:$0xff]
        %v412 = vld [vmem:[%s199 + $0x10] sm:$0xff]
        %v413 = vld [vmem:[%s199 + $0x18] sm:$0xff]
        %v414 = vld [vmem:[%s199 + $0x20] sm:$0xff]
        %v415 = vld [vmem:[%s199 + $0x28] sm:$0xff]
        %v416 = vld [vmem:[%s199 + $0x30] sm:$0xff]
        %v417 = vld [vmem:[%s199 + $0x38] sm:$0xff]
        %v418 = vld [vmem:[%s199 + $0x40] sm:$0xff]
        %v419 = vld [vmem:[%s199 + $0x48] sm:$0xff]
        %v420 = vld [vmem:[%s199 + $0x50] sm:$0xff]
        %v421 = vld [vmem:[%s199 + $0x58] sm:$0xff]
        %v422 = vld [vmem:[%s199 + $0x60] sm:$0xff]
        %v423 = vld [vmem:[%s199 + $0x68] sm:$0xff]
        %v424 = vld [vmem:[%s199 + $0x70] sm:$0xff]
        %v425 = vld [vmem:[%s199 + $0x78] sm:$0xff]
        %v426 = vld [vmem:[%s199 + $0x80] sm:$0xff]
        %v427 = vld [vmem:[%s199 + $0x88] sm:$0xff]
        %v428 = vld [vmem:[%s199 + $0x90] sm:$0xff]
        %v429 = vld [vmem:[%s199 + $0x98] sm:$0xff]
        %v430 = vld [vmem:[%s199 + $0xa0] sm:$0xff]
        %v431 = vld [vmem:[%s199 + $0xa8] sm:$0xff]
        %v432 = vld [vmem:[%s199 + $0xb0] sm:$0xff]
        %v433 = vld [vmem:[%s199 + $0xb8] sm:$0xff]
        %v434 = vld [vmem:[%s199 + $0xc0] sm:$0xff]
        %v435 = vld [vmem:[%s199 + $0xc8] sm:$0xff]
        %v436 = vld [vmem:[%s199 + $0xd0] sm:$0xff]
        %v437 = vld [vmem:[%s199 + $0xd8] sm:$0xff]
        %v438 = vld [vmem:[%s199 + $0xe0] sm:$0xff]
        %v439 = vld [vmem:[%s199 + $0xe8] sm:$0xff]
        %v440 = vld [vmem:[%s199 + $0xf0] sm:$0xff]
        %v441 = vld [vmem:[%s199 + $0xf8] sm:$0xff]
        %v442 = vld [vmem:[%s199 + $0x100] sm:$0xff]
        %v443 = vld [vmem:[%s199 + $0x108] sm:$0xff]
        %v444 = vld [vmem:[%s199 + $0x110] sm:$0xff]
        %v445 = vld [vmem:[%s199 + $0x118] sm:$0xff]
        %v446 = vld [vmem:[%s199 + $0x120] sm:$0xff]
        %v447 = vld [vmem:[%s199 + $0x128] sm:$0xff]
        %v448 = vld [vmem:[%s199 + $0x130] sm:$0xff]
        %v449 = vld [vmem:[%s199 + $0x138] sm:$0xff]
        %v450 = vld [vmem:[%s199 + $0x140] sm:$0xff]
        %v451 = vld [vmem:[%s199 + $0x148] sm:$0xff]
        %v452 = vld [vmem:[%s199 + $0x150] sm:$0xff]
        %v453 = vld [vmem:[%s199 + $0x158] sm:$0xff]
        %v454 = vld [vmem:[%s199 + $0x160] sm:$0xff]
        %v455 = vld [vmem:[%s199 + $0x168] sm:$0xff]
        %v456 = vld [vmem:[%s199 + $0x170] sm:$0xff]
        %v457 = vld [vmem:[%s199 + $0x178] sm:$0xff]
        %v458 = vld [vmem:[%s199 + $0x180] sm:$0xff]
        %v459 = vld [vmem:[%s199 + $0x188] sm:$0xff]
        %v460 = vld [vmem:[%s199 + $0x190] sm:$0xff]
        %v461 = vld [vmem:[%s199 + $0x198] sm:$0xff]
        %v462 = vld [vmem:[%s199 + $0x1a0] sm:$0xff]
        %v463 = vld [vmem:[%s199 + $0x1a8] sm:$0xff]
        %v464 = vld [vmem:[%s199 + $0x1b0] sm:$0xff]
        %v465 = vld [vmem:[%s199 + $0x1b8] sm:$0xff]
        %v466 = vld [vmem:[%s199 + $0x1c0] sm:$0xff]
        %v467 = vld [vmem:[%s199 + $0x1c8] sm:$0xff]
        %v468 = vld [vmem:[%s199 + $0x1d0] sm:$0xff]
        %v469 = vld [vmem:[%s199 + $0x1d8] sm:$0xff]
        %v470 = vld [vmem:[%s199 + $0x1e0] sm:$0xff]
        %v471 = vld [vmem:[%s199 + $0x1e8] sm:$0xff]
        %v472 = vld [vmem:[%s199 + $0x1f0] sm:$0xff]
        %v473 = vld [vmem:[%s199 + $0x1f8] sm:$0xff]
        %474 = vmatprep.subr.mxu0 %v411
        %475 = vmatpush1.msra.mxu0 %v410
        %476 = vmatprep.subr.mxu0 %v413
        %477 = vmatpush1.msra.mxu0 %v412
        %478 = vmatprep.subr.mxu0 %v415
        %479 = vmatpush1.msra.mxu0 %v414
        %480 = vmatprep.subr.mxu0 %v417
        %481 = vmatpush1.msra.mxu0 %v416
        %482 = vmatprep.subr.mxu0 %v419
        %483 = vmatpush1.msra.mxu0 %v418
        %484 = vmatprep.subr.mxu0 %v421
        %485 = vmatpush1.msra.mxu0 %v420
        %486 = vmatprep.subr.mxu0 %v423
        %487 = vmatpush1.msra.mxu0 %v422
        %488 = vmatprep.subr.mxu0 %v425
        %489 = vmatpush1.msra.mxu0 %v424
        %490 = vmatprep.subr.mxu0 %v427
        %491 = vmatpush1.msra.mxu0 %v426
        %492 = vmatprep.subr.mxu0 %v429
        %493 = vmatpush1.msra.mxu0 %v428
        %494 = vmatprep.subr.mxu0 %v431
        %495 = vmatpush1.msra.mxu0 %v430
        %496 = vmatprep.subr.mxu0 %v433
        %497 = vmatpush1.msra.mxu0 %v432
        %498 = vmatprep.subr.mxu0 %v435
        %499 = vmatpush1.msra.mxu0 %v434
        %500 = vmatprep.subr.mxu0 %v437
        %501 = vmatpush1.msra.mxu0 %v436
        %502 = vmatprep.subr.mxu0 %v439
        %503 = vmatpush1.msra.mxu0 %v438
        %504 = vmatprep.subr.mxu0 %v441
        %505 = vmatpush1.msra.mxu0 %v440
        %506 = vmatprep.subr.mxu0 %v443
        %507 = vmatpush1.msra.mxu0 %v442
        %508 = vmatprep.subr.mxu0 %v445
        %509 = vmatpush1.msra.mxu0 %v444
        %510 = vmatprep.subr.mxu0 %v447
        %511 = vmatpush1.msra.mxu0 %v446
        %512 = vmatprep.subr.mxu0 %v449
        %513 = vmatpush1.msra.mxu0 %v448
        %514 = vmatprep.subr.mxu0 %v451
        %515 = vmatpush1.msra.mxu0 %v450
        %516 = vmatprep.subr.mxu0 %v453
        %517 = vmatpush1.msra.mxu0 %v452
        %518 = vmatprep.subr.mxu0 %v455
        %519 = vmatpush1.msra.mxu0 %v454
        %520 = vmatprep.subr.mxu0 %v457
        %521 = vmatpush1.msra.mxu0 %v456
        %522 = vmatprep.subr.mxu0 %v459
        %523 = vmatpush1.msra.mxu0 %v458
        %524 = vmatprep.subr.mxu0 %v461
        %525 = vmatpush1.msra.mxu0 %v460
        %526 = vmatprep.subr.mxu0 %v463
        %527 = vmatpush1.msra.mxu0 %v462
        %528 = vmatprep.subr.mxu0 %v465
        %529 = vmatpush1.msra.mxu0 %v464
        %530 = vmatprep.subr.mxu0 %v467
        %531 = vmatpush1.msra.mxu0 %v466
        %532 = vmatprep.subr.mxu0 %v469
        %533 = vmatpush1.msra.mxu0 %v468
        %534 = vmatprep.subr.mxu0 %v471
        %535 = vmatpush1.msra.mxu0 %v470
        %536 = vmatprep.subr.mxu0 %v473
        %537 = vmatpush1.msra.mxu0 %v472
        %538 = vmatprep.mubr.f32.mxu0 %v407
        %539 = vmatmul.mubr.f32.gmra.mrb[0].mxu0 %v406
        %v540 = vpop.f32.mrb[0].mxu0
        %v541 = vadd.f32 128.0, %v540
        %v542 = vpop.f32.mrb[0].mxu0
        %v543 = vadd.f32 128.0, %v542
        %544 = vmatprep.mubr.f32.mxu0 %v409
        %545 = vmatmul.mubr.f32.gmra.mrb[0].mxu0 %v408
        %v546 = vpop.f32.mrb[0].mxu0
        %v547 = vadd.f32 128.0, %v546
        %v548 = vpop.f32.mrb[0].mxu0
        %v549 = vadd.f32 128.0, %v548
        %550 = vdwg.mxu0
        %v551 = vround.ne.pseudo %v541
        %v552 = vround.ne.pseudo %v543
        %v553 = vround.ne.pseudo %v547
        %v554 = vround.ne.pseudo %v549
        %v555 = vmax.f32 %v551, 0.0
        %v556 = vmax.f32 %v552, 0.0
        %v557 = vmax.f32 %v553, 0.0
        %v558 = vmax.f32 %v554, 0.0
        %v559 = vmin.f32 %v555, 255.0
        %v560 = vmin.f32 %v556, 255.0
        %v561 = vmin.f32 %v557, 255.0
        %v562 = vmin.f32 %v558, 255.0
        %v563 = vpack.c.bf16 %v561, %v559
        %v564 = vpack.c.bf16 %v562, %v560
        %v567 = vunpack.c.l.b16 %v563
        %v568 = vunpack.c.l.b16 %v564
        %v569 = vunpack.c.h.b16 %v563
        %v570 = vunpack.c.h.b16 %v564
        %v571 = vpack.c.b16 %v568, %v567
        %v572 = vpack.c.b16 %v570, %v569
        %575 = vst [vmem:[%s255] sm:$0xff] %v571
        %576 = vst [vmem:[%s255 + $0x8] sm:$0xff] %v572
        %s577 = smul.u32 2, %s24
        %p578 = scmp.lt.s32.totalorder %s577, 3
        %s579 = scalar_select %p578, %s577, 3
        %s580 = smul.addr %s579, 2
        %s581 = smul.addr %s580, 4
        %s582 = scalar_lea.vmem %s4, %s581
        // Predicated region
        $region37: #{_png2jpg_core.1} parent=31 // pred_check
          %p583 = pneg %p124
        $region38: #{_png2jpg_core.1} parent=31 // pred_check_branch
          %585 = sbr.rel (%p583) target = $region40
        $region39: #{_png2jpg_core.1} parent=31 // pred_region
          %s586 = smul.u32 2, %s24
        $region40: #{_png2jpg_core.1} parent=31 // pred_fallthru
          _
      $region32: #{_png2jpg_core.1} parent=5 // pred_fallthru
        _
      %p587 = scmp.le.s32.totalorder 2, %s19
      // Predicated region
      $region41: #{_png2jpg_core.1} parent=5 // pred_check
        %p588 = pneg %p587
      $region42: #{_png2jpg_core.1} parent=5 // pred_check_branch
        %590 = sbr.rel (%p588) target = $region44
      $region43: #{_png2jpg_core.1} parent=5 // pred_region
        %s591 = ssub.s32 %s19, 2
        // Predicated region
        $region45: #{_png2jpg_core.1} parent=43 // pred_check
          %p592 = pneg %p130
        $region46: #{_png2jpg_core.1} parent=43 // pred_check_branch
          %594 = sbr.rel (%p592) target = $region48
        $region47: #{_png2jpg_core.1} parent=43 // pred_region
          %s595 = smul.u32 2, %s25
          %p596 = scmp.lt.s32.totalorder %s595, 3
          %s597 = scalar_select %p596, %s595, 3
          %s598 = smul.addr %s597, 2
          %s599 = smul.addr %s598, 4
          %s600 = scalar_lea.vmem %s4, %s599
        $region48: #{_png2jpg_core.1} parent=43 // pred_fallthru
          _
      $region44: #{_png2jpg_core.1} parent=5 // pred_fallthru
        _
    $region6: #{_png2jpg_core.1} parent=1 // loop_footer
      %s23 = sadd.s32 1, %s19
    $region7: #{_png2jpg_core.1} parent=1 // loop_footer_branch
      %18 = sbr.rel target = $region3
    $region8: #{_png2jpg_core.1} parent=1 // loop_exit
      _
    %601 = vsyncpa [#allocation5], 1
    %s602 = scalar_lea.sflag [#allocation5], 1
    %603 = vsyncpa %s602, 1

</llo_original>
